<compile_context>
chip_gen: v6e
topology: v6e:2x2x1
jax: 0.10.0
libtpu: 0.0.40
codegen_flags: <defaults>
</compile_context>

<pallas_src>
import jax
import jax.numpy as jnp
from jax.experimental import pallas as pl
from jax.experimental.pallas import tpu as pltpu

# ---- hyper-parameters implied by the module's __init__ ----
NUM_PLAYER_FEATURES = 4
NUM_OPP_META_FEATURES = 8
IN_FEATURES = NUM_PLAYER_FEATURES * NUM_OPP_META_FEATURES  # 32
HIDDEN = 64
ONE_SEASON_OUTPUT_N = 16
LN_EPS = 1e-5  # torch.nn.LayerNorm default

# packed-slab layout (rows of the (16, HIDDEN) vector slab)
_ROW_MEANS, _ROW_INVSTD, _ROW_BEMB, _ROW_G1, _ROW_BETA1 = 0, 1, 2, 3, 4
_ROW_WATTN, _ROW_BOUT, _ROW_G2, _ROW_BETA2, _ROW_BATTN = 5, 6, 7, 8, 9
_VEC_ROWS = 16  # padded to a multiple of 8 sublanes


def _one_season_kernel(
    x_ref,     # (N, IN_FEATURES)                 flattened, un-normalized rows
    wp_ref,    # (IN_FEATURES + HIDDEN, HIDDEN)   [w_emb ; w_out padded to 64 lanes]
    vec_ref,   # (_VEC_ROWS, HIDDEN)              packed per-feature vectors
    o_ref,     # (1, ONE_SEASON_OUTPUT_N)
):
    # ---- unpack parameter slabs (static slices -> cheap VMEM loads) ----
    means   = vec_ref[_ROW_MEANS:_ROW_MEANS + 1, 0:IN_FEATURES]
    inv_std = vec_ref[_ROW_INVSTD:_ROW_INVSTD + 1, 0:IN_FEATURES]
    b_emb   = vec_ref[_ROW_BEMB:_ROW_BEMB + 1, :]
    g1      = vec_ref[_ROW_G1:_ROW_G1 + 1, :]
    beta1   = vec_ref[_ROW_BETA1:_ROW_BETA1 + 1, :]
    w_attn  = vec_ref[_ROW_WATTN:_ROW_WATTN + 1, :]
    b_out   = vec_ref[_ROW_BOUT:_ROW_BOUT + 1, 0:ONE_SEASON_OUTPUT_N]
    g2      = vec_ref[_ROW_G2:_ROW_G2 + 1, 0:ONE_SEASON_OUTPUT_N]
    beta2   = vec_ref[_ROW_BETA2:_ROW_BETA2 + 1, 0:ONE_SEASON_OUTPUT_N]
    b_attn  = vec_ref[_ROW_BATTN:_ROW_BATTN + 1, 0:1]

    w_emb = wp_ref[0:IN_FEATURES, :]                                        # (32, 64)
    w_out = wp_ref[IN_FEATURES:IN_FEATURES + HIDDEN, 0:ONE_SEASON_OUTPUT_N]  # (64, 16)

    # ---- feature normalization (1/std pre-folded in the wrapper) ----
    x = (x_ref[...] - means) * inv_std

    # ---- embedding LinearCell: Linear -> ReLU -> LayerNorm -> Dropout(id) ----
    h = jnp.dot(x, w_emb, preferred_element_type=jnp.float32) + b_emb
    h = jnp.maximum(h, 0.0)
    mu = jnp.mean(h, axis=-1, keepdims=True)
    var = jnp.mean((h - mu) ** 2, axis=-1, keepdims=True)
    h = (h - mu) * jax.lax.rsqrt(var + LN_EPS) * g1 + beta1
    # TODO(synk): nn.Dropout(SPREAD_DROPOUT_RATE) is identity here (inference).

    # ---- AttentionPooling over all flattened rows (matches season.unsqueeze(0)) ----
    s = jnp.sum(h * w_attn, axis=-1, keepdims=True) + b_attn   # (N, 1)
    s = s - jnp.max(s, axis=0, keepdims=True)
    e = jnp.exp(s)
    denom = jnp.sum(e, axis=0, keepdims=True)                  # (1, 1)
    attn = e * pl.reciprocal(denom, approx=True)               # EUP recip, free slot
    pooled = jnp.sum(attn * h, axis=0, keepdims=True)          # (1, HIDDEN)
    # TODO(synk): for very long seasons (large B*S), compute `pooled` as a
    # (1,N)@(N,64) dot_general on the MXU and tile rows with an online softmax.

    # ---- output LinearCell ----
    o = jnp.dot(pooled, w_out, preferred_element_type=jnp.float32) + b_out
    o = jnp.maximum(o, 0.0)
    mu2 = jnp.mean(o, axis=-1, keepdims=True)
    var2 = jnp.mean((o - mu2) ** 2, axis=-1, keepdims=True)
    o_ref[...] = (o - mu2) * jax.lax.rsqrt(var2 + LN_EPS) * g2 + beta2


def pack_params(p):
    """One-time wrapper-side packing of all small params into two VMEM slabs."""
    wp = jnp.zeros((IN_FEATURES + HIDDEN, HIDDEN), jnp.float32)
    wp = wp.at[0:IN_FEATURES, :].set(p["w_emb"])
    wp = wp.at[IN_FEATURES:, 0:ONE_SEASON_OUTPUT_N].set(p["w_out"])

    vec = jnp.zeros((_VEC_ROWS, HIDDEN), jnp.float32)
    vec = vec.at[_ROW_MEANS, 0:IN_FEATURES].set(p["means"][0])
    vec = vec.at[_ROW_INVSTD, 0:IN_FEATURES].set(1.0 / p["stds"][0])  # fold 1/std
    vec = vec.at[_ROW_BEMB, :].set(p["b_emb"][0])
    vec = vec.at[_ROW_G1, :].set(p["g1"][0])
    vec = vec.at[_ROW_BETA1, :].set(p["beta1"][0])
    vec = vec.at[_ROW_WATTN, :].set(p["w_attn"][0])
    vec = vec.at[_ROW_BOUT, 0:ONE_SEASON_OUTPUT_N].set(p["b_out"][0])
    vec = vec.at[_ROW_G2, 0:ONE_SEASON_OUTPUT_N].set(p["g2"][0])
    vec = vec.at[_ROW_BETA2, 0:ONE_SEASON_OUTPUT_N].set(p["beta2"][0])
    vec = vec.at[_ROW_BATTN, 0:1].set(p["b_attn"][0])
    return wp, vec


def one_season_forward(season, w_packed, vec_packed):
    """season: (B, S, P, O) float32. Returns (1, ONE_SEASON_OUTPUT_N)."""
    B, S, P, O = season.shape
    if S == 0:  # matches `if season.size(1) == 0:` (static shape check)
        return jnp.zeros((1, ONE_SEASON_OUTPUT_N), dtype=jnp.float32)

    x = season.reshape(B * S, P * O).astype(jnp.float32)
    N = B * S

    cost = pl.CostEstimate(
        flops=2 * N * IN_FEATURES * HIDDEN      # embedding matmul
        + 2 * HIDDEN * ONE_SEASON_OUTPUT_N      # output matmul
        + 10 * N * HIDDEN,                      # elementwise / LN / attention
        transcendentals=2 * N + 2,              # exp + rsqrt
        bytes_accessed=4 * (x.size + w_packed.size + vec_packed.size
                            + ONE_SEASON_OUTPUT_N),
    )

    vmem_spec = pl.BlockSpec(memory_space=pltpu.MemorySpace.VMEM)
    return pl.pallas_call(
        _one_season_kernel,
        out_shape=jax.ShapeDtypeStruct((1, ONE_SEASON_OUTPUT_N), jnp.float32),
        in_specs=[vmem_spec, vmem_spec, vmem_spec],
        out_specs=vmem_spec,
        cost_estimate=cost,
    )(x, w_packed, vec_packed)


def init_params(key):
    ks = jax.random.split(key, 6)

    def lin_w(k, fan_in, fan_out):
        bound = 1.0 / jnp.sqrt(fan_in)
        return jax.random.uniform(k, (fan_in, fan_out), jnp.float32, -bound, bound)

    return {
        "means": jax.random.normal(ks[0], (1, IN_FEATURES), jnp.float32) * 0.5,
        "stds": jax.random.uniform(ks[1], (1, IN_FEATURES), jnp.float32, 0.5, 2.0),
        "w_emb": lin_w(ks[2], IN_FEATURES, HIDDEN),
        "b_emb": jnp.zeros((1, HIDDEN), jnp.float32),
        "g1": jnp.ones((1, HIDDEN), jnp.float32),
        "beta1": jnp.zeros((1, HIDDEN), jnp.float32),
        "w_attn": lin_w(ks[3], HIDDEN, 1).T,          # stored as (1, HIDDEN)
        "b_attn": jnp.zeros((1, 1), jnp.float32),
        "w_out": lin_w(ks[4], HIDDEN, ONE_SEASON_OUTPUT_N),
        "b_out": jnp.zeros((1, ONE_SEASON_OUTPUT_N), jnp.float32),
        "g2": jnp.ones((1, ONE_SEASON_OUTPUT_N), jnp.float32),
        "beta2": jnp.zeros((1, ONE_SEASON_OUTPUT_N), jnp.float32),
    }


def reference_forward(season, p):
    B, S, P, O = season.shape
    x = season.reshape(B * S, P * O)
    x = (x - p["means"]) / p["stds"]
    h = jnp.maximum(x @ p["w_emb"] + p["b_emb"], 0.0)
    mu = h.mean(-1, keepdims=True); var = ((h - mu) ** 2).mean(-1, keepdims=True)
    h = (h - mu) / jnp.sqrt(var + LN_EPS) * p["g1"] + p["beta1"]
    s = jnp.sum(h * p["w_attn"], -1, keepdims=True) + p["b_attn"]
    attn = jax.nn.softmax(s, axis=0)
    pooled = jnp.sum(attn * h, axis=0, keepdims=True)
    o = jnp.maximum(pooled @ p["w_out"] + p["b_out"], 0.0)
    mu2 = o.mean(-1, keepdims=True); var2 = ((o - mu2) ** 2).mean(-1, keepdims=True)
    return (o - mu2) / jnp.sqrt(var2 + LN_EPS) * p["g2"] + p["beta2"]


if __name__ == "__main__":
    key = jax.random.PRNGKey(0)
    pkey, xkey = jax.random.split(key)
    params = init_params(pkey)
    w_packed, vec_packed = pack_params(params)   # one-time packing (constants)

    B, S = 2, 8
    season = jax.random.normal(
        xkey, (B, S, NUM_PLAYER_FEATURES, NUM_OPP_META_FEATURES), jnp.float32)

    out = one_season_forward(season, w_packed, vec_packed)
    out = jax.block_until_ready(out)

    ref = reference_forward(season, params)
    assert out.shape == (1, ONE_SEASON_OUTPUT_N)
    assert jnp.allclose(out, ref, atol=2e-3, rtol=2e-3), (out, ref)
    print("KERNEL_OK")
</pallas_src>

<mosaic_0001>
module attributes {stable_mosaic.version = 11 : i64} {
  func.func @_one_season_kernel(%arg0: memref<16x32xf32, #tpu.memory_space<vmem>>, %arg1: memref<96x64xf32, #tpu.memory_space<vmem>>, %arg2: memref<16x64xf32, #tpu.memory_space<vmem>>, %arg3: memref<1x16xf32, #tpu.memory_space<vmem>>) attributes {dimension_semantics = [], scalar_prefetch = 0 : i64, scratch_operands = 0 : i64, tpu.core_type = #tpu.core_type<tc>} {
    %c0 = arith.constant 0 : index
    %c0_0 = arith.constant 0 : index
    %0 = vector.load %arg2[%c0, %c0_0] : memref<16x64xf32, #tpu.memory_space<vmem>>, vector<1x32xf32>
    %c1 = arith.constant 1 : index
    %c0_1 = arith.constant 0 : index
    %1 = vector.load %arg2[%c1, %c0_1] : memref<16x64xf32, #tpu.memory_space<vmem>>, vector<1x32xf32>
    %c2 = arith.constant 2 : index
    %c0_2 = arith.constant 0 : index
    %2 = vector.load %arg2[%c2, %c0_2] : memref<16x64xf32, #tpu.memory_space<vmem>>, vector<1x64xf32>
    %c3 = arith.constant 3 : index
    %c0_3 = arith.constant 0 : index
    %3 = vector.load %arg2[%c3, %c0_3] : memref<16x64xf32, #tpu.memory_space<vmem>>, vector<1x64xf32>
    %c4 = arith.constant 4 : index
    %c0_4 = arith.constant 0 : index
    %4 = vector.load %arg2[%c4, %c0_4] : memref<16x64xf32, #tpu.memory_space<vmem>>, vector<1x64xf32>
    %c5 = arith.constant 5 : index
    %c0_5 = arith.constant 0 : index
    %5 = vector.load %arg2[%c5, %c0_5] : memref<16x64xf32, #tpu.memory_space<vmem>>, vector<1x64xf32>
    %c6 = arith.constant 6 : index
    %c0_6 = arith.constant 0 : index
    %6 = vector.load %arg2[%c6, %c0_6] : memref<16x64xf32, #tpu.memory_space<vmem>>, vector<1x16xf32>
    %c7 = arith.constant 7 : index
    %c0_7 = arith.constant 0 : index
    %7 = vector.load %arg2[%c7, %c0_7] : memref<16x64xf32, #tpu.memory_space<vmem>>, vector<1x16xf32>
    %c8 = arith.constant 8 : index
    %c0_8 = arith.constant 0 : index
    %8 = vector.load %arg2[%c8, %c0_8] : memref<16x64xf32, #tpu.memory_space<vmem>>, vector<1x16xf32>
    %c9 = arith.constant 9 : index
    %c0_9 = arith.constant 0 : index
    %9 = vector.load %arg2[%c9, %c0_9] : memref<16x64xf32, #tpu.memory_space<vmem>>, vector<1x1xf32>
    %c0_10 = arith.constant 0 : index
    %c0_11 = arith.constant 0 : index
    %10 = vector.load %arg1[%c0_10, %c0_11] : memref<96x64xf32, #tpu.memory_space<vmem>>, vector<32x64xf32>
    %c32 = arith.constant 32 : index
    %c0_12 = arith.constant 0 : index
    %11 = vector.load %arg1[%c32, %c0_12] : memref<96x64xf32, #tpu.memory_space<vmem>>, vector<64x16xf32>
    %c0_13 = arith.constant 0 : index
    %c0_14 = arith.constant 0 : index
    %12 = vector.load %arg0[%c0_13, %c0_14] : memref<16x32xf32, #tpu.memory_space<vmem>>, vector<16x32xf32>
    %13 = vector.broadcast %0 : vector<1x32xf32> to vector<16x32xf32>
    %14 = arith.subf %12, %13 : vector<16x32xf32>
    %15 = vector.broadcast %1 : vector<1x32xf32> to vector<16x32xf32>
    %16 = arith.mulf %14, %15 : vector<16x32xf32>
    %cst = arith.constant dense<0.000000e+00> : vector<16x64xf32>
    %17 = tpu.matmul %16, %10, %cst {dimension_numbers = #tpu.dot_dimension_numbers<[1], [0], [0], [1], [0, 0, 1, 1], [], []>} : vector<16x32xf32>, vector<32x64xf32>, vector<16x64xf32> -> vector<16x64xf32>
    %18 = vector.broadcast %2 : vector<1x64xf32> to vector<16x64xf32>
    %19 = arith.addf %17, %18 : vector<16x64xf32>
    %cst_15 = arith.constant 0.000000e+00 : f32
    %20 = vector.broadcast %cst_15 : f32 to vector<16x64xf32>
    %21 = arith.maximumf %19, %20 : vector<16x64xf32>
    %cst_16 = arith.constant dense<0.000000e+00> : vector<16xf32>
    %22 = vector.multi_reduction <add>, %21, %cst_16 [1] : vector<16x64xf32> to vector<16xf32>
    %23 = vector.shape_cast %22 : vector<16xf32> to vector<16x1xf32>
    %cst_17 = arith.constant 6.400000e+01 : f32
    %24 = vector.broadcast %cst_17 : f32 to vector<16x1xf32>
    %25 = arith.divf %23, %24 : vector<16x1xf32>
    %26 = vector.broadcast %25 : vector<16x1xf32> to vector<16x64xf32>
    %27 = arith.subf %21, %26 : vector<16x64xf32>
    %28 = arith.mulf %27, %27 : vector<16x64xf32>
    %cst_18 = arith.constant dense<0.000000e+00> : vector<16xf32>
    %29 = vector.multi_reduction <add>, %28, %cst_18 [1] : vector<16x64xf32> to vector<16xf32>
    %30 = vector.shape_cast %29 : vector<16xf32> to vector<16x1xf32>
    %cst_19 = arith.constant 6.400000e+01 : f32
    %31 = vector.broadcast %cst_19 : f32 to vector<16x1xf32>
    %32 = arith.divf %30, %31 : vector<16x1xf32>
    %33 = vector.broadcast %25 : vector<16x1xf32> to vector<16x64xf32>
    %34 = arith.subf %21, %33 : vector<16x64xf32>
    %cst_20 = arith.constant 9.99999974E-6 : f32
    %35 = vector.broadcast %cst_20 : f32 to vector<16x1xf32>
    %36 = arith.addf %32, %35 : vector<16x1xf32>
    %37 = math.rsqrt %36 : vector<16x1xf32>
    %38 = vector.broadcast %37 : vector<16x1xf32> to vector<16x64xf32>
    %39 = arith.mulf %34, %38 : vector<16x64xf32>
    %40 = vector.broadcast %3 : vector<1x64xf32> to vector<16x64xf32>
    %41 = arith.mulf %39, %40 : vector<16x64xf32>
    %42 = vector.broadcast %4 : vector<1x64xf32> to vector<16x64xf32>
    %43 = arith.addf %41, %42 : vector<16x64xf32>
    %44 = vector.broadcast %5 : vector<1x64xf32> to vector<16x64xf32>
    %45 = arith.mulf %43, %44 : vector<16x64xf32>
    %cst_21 = arith.constant dense<0.000000e+00> : vector<16xf32>
    %46 = vector.multi_reduction <add>, %45, %cst_21 [1] : vector<16x64xf32> to vector<16xf32>
    %47 = vector.shape_cast %46 : vector<16xf32> to vector<16x1xf32>
    %48 = vector.broadcast %9 : vector<1x1xf32> to vector<16x1xf32>
    %49 = arith.addf %47, %48 : vector<16x1xf32>
    %cst_22 = arith.constant dense<0xFF800000> : vector<1xf32>
    %50 = vector.multi_reduction <maximumf>, %49, %cst_22 [0] : vector<16x1xf32> to vector<1xf32>
    %51 = vector.shape_cast %50 : vector<1xf32> to vector<1x1xf32>
    %52 = vector.broadcast %51 : vector<1x1xf32> to vector<16x1xf32>
    %53 = arith.subf %49, %52 : vector<16x1xf32>
    %54 = math.exp %53 : vector<16x1xf32>
    %cst_23 = arith.constant dense<0.000000e+00> : vector<1xf32>
    %55 = vector.multi_reduction <add>, %54, %cst_23 [0] : vector<16x1xf32> to vector<1xf32>
    %56 = vector.shape_cast %55 : vector<1xf32> to vector<1x1xf32>
    %57 = tpu.reciprocal %56 {approx = true} : vector<1x1xf32> -> vector<1x1xf32>
    %58 = vector.broadcast %57 : vector<1x1xf32> to vector<16x1xf32>
    %59 = arith.mulf %54, %58 : vector<16x1xf32>
    %60 = vector.broadcast %59 : vector<16x1xf32> to vector<16x64xf32>
    %61 = arith.mulf %60, %43 : vector<16x64xf32>
    %cst_24 = arith.constant dense<0.000000e+00> : vector<64xf32>
    %62 = vector.multi_reduction <add>, %61, %cst_24 [0] : vector<16x64xf32> to vector<64xf32>
    %63 = vector.shape_cast %62 : vector<64xf32> to vector<1x64xf32>
    %cst_25 = arith.constant dense<0.000000e+00> : vector<1x16xf32>
    %64 = tpu.matmul %63, %11, %cst_25 {dimension_numbers = #tpu.dot_dimension_numbers<[1], [0], [0], [1], [0, 0, 1, 1], [], []>} : vector<1x64xf32>, vector<64x16xf32>, vector<1x16xf32> -> vector<1x16xf32>
    %65 = arith.addf %64, %6 : vector<1x16xf32>
    %cst_26 = arith.constant 0.000000e+00 : f32
    %66 = vector.broadcast %cst_26 : f32 to vector<1x16xf32>
    %67 = arith.maximumf %65, %66 : vector<1x16xf32>
    %cst_27 = arith.constant dense<0.000000e+00> : vector<1xf32>
    %68 = vector.multi_reduction <add>, %67, %cst_27 [1] : vector<1x16xf32> to vector<1xf32>
    %69 = vector.shape_cast %68 : vector<1xf32> to vector<1x1xf32>
    %cst_28 = arith.constant 1.600000e+01 : f32
    %70 = vector.broadcast %cst_28 : f32 to vector<1x1xf32>
    %71 = arith.divf %69, %70 : vector<1x1xf32>
    %72 = vector.broadcast %71 : vector<1x1xf32> to vector<1x16xf32>
    %73 = arith.subf %67, %72 : vector<1x16xf32>
    %74 = arith.mulf %73, %73 : vector<1x16xf32>
    %cst_29 = arith.constant dense<0.000000e+00> : vector<1xf32>
    %75 = vector.multi_reduction <add>, %74, %cst_29 [1] : vector<1x16xf32> to vector<1xf32>
    %76 = vector.shape_cast %75 : vector<1xf32> to vector<1x1xf32>
    %cst_30 = arith.constant 1.600000e+01 : f32
    %77 = vector.broadcast %cst_30 : f32 to vector<1x1xf32>
    %78 = arith.divf %76, %77 : vector<1x1xf32>
    %79 = vector.broadcast %71 : vector<1x1xf32> to vector<1x16xf32>
    %80 = arith.subf %67, %79 : vector<1x16xf32>
    %cst_31 = arith.constant 9.99999974E-6 : f32
    %81 = vector.broadcast %cst_31 : f32 to vector<1x1xf32>
    %82 = arith.addf %78, %81 : vector<1x1xf32>
    %83 = math.rsqrt %82 : vector<1x1xf32>
    %84 = vector.broadcast %83 : vector<1x1xf32> to vector<1x16xf32>
    %85 = arith.mulf %80, %84 : vector<1x16xf32>
    %86 = arith.mulf %85, %7 : vector<1x16xf32>
    %87 = arith.addf %86, %8 : vector<1x16xf32>
    %c0_32 = arith.constant 0 : index
    %c0_33 = arith.constant 0 : index
    %88 = vector.load %arg3[%c0_32, %c0_33] : memref<1x16xf32, #tpu.memory_space<vmem>>, vector<1x16xf32>
    tpu.vector_store %arg3[%c0_32, %c0_33], %87 {strides = array<i32>} : memref<1x16xf32, #tpu.memory_space<vmem>>, vector<1x16xf32>,
    return
  }
}

</mosaic_0001>

<llo_original>
// kernel: tpu_custom_call.1
$region0: #{tpu_custom_call.1}
  #allocation0 [shape = 'u32[]', space=smem, size = 0x4, offset = 0x4, fixed_abs, tag = 'smem constant byte address 0x4 - core index']
  #allocation1 [shape = 'u32[144,128]{1,0:T(1,128)}', space=vmem, size = 0x12000, scoped, tag = 'internal scratch']
  %s0 = inlined_call_operand.vmem [shape: f32[16,32], index: 0, kind: input, shape index: {}]
  %s1 = inlined_call_operand.vmem [shape: f32[96,64], index: 1, kind: input, shape index: {}]
  %s2 = inlined_call_operand.vmem [shape: f32[16,64], index: 2, kind: input, shape index: {}]
  %s3 = inlined_call_operand.hbm [shape: f32[1,16], index: 3, kind: output, shape index: {}]
  %s4 = sld [smem:[#allocation0]]
  $region22: #{tpu_custom_call.1} parent=0
    _
  %s6 = ssub.s32 1, %s4
  %s7 = scalar_select 0, %s6, %s4
  $region1: #{tpu_custom_call.1} parent=0
    #allocation2 [shape = 'u8[512]{0}', space=vmem, size = 0x400, scoped, tag = 'output window, operand 0, single buffered']
    #allocation3 [shape = 's32[1]{0}', space=sflag, size = 0x4, scoped, tag = 'scoped memory for tpu_custom_call.1']
    %8 = vsyncpa [#allocation3], 0
    // Predicated region
    $region2: #{tpu_custom_call.1} parent=1 // pred_check
      _
    $region3: #{tpu_custom_call.1} parent=1 // pred_check_branch
      %10 = sbr.rel (0) target = $region5
    $region4: #{tpu_custom_call.1} parent=1 // pred_region
      _
    $region5: #{tpu_custom_call.1} parent=1 // pred_fallthru
      _
    // Predicated region
    $region6: #{tpu_custom_call.1} parent=1 // pred_check
      _
    $region7: #{tpu_custom_call.1} parent=1 // pred_check_branch
      %12 = sbr.rel (0) target = $region9
    $region8: #{tpu_custom_call.1} parent=1 // pred_region
      _
    $region9: #{tpu_custom_call.1} parent=1 // pred_fallthru
      _
    // Predicated region
    $region10: #{tpu_custom_call.1} parent=1 // pred_check
      _
    $region11: #{tpu_custom_call.1} parent=1 // pred_check_branch
      %14 = sbr.rel (0) target = $region13
    $region12: #{tpu_custom_call.1} parent=1 // pred_region
      _
    $region13: #{tpu_custom_call.1} parent=1 // pred_fallthru
      _
    %v15 = vld [vmem:[%s2] sm:$0x1]
    %v16 = vld [vmem:[%s2 + $0x1] sm:$0x1]
    %v17 = vld [vmem:[%s2 + $0x2] sm:$0x1]
    %v18 = vld [vmem:[%s2 + $0x3] sm:$0x1]
    %v19 = vld [vmem:[%s2 + $0x4] sm:$0x1]
    %v20 = vld [vmem:[%s2 + $0x5] sm:$0x1]
    %v21 = vld [vmem:[%s2 + $0x6] sm:$0x1]
    %v22 = vld [vmem:[%s2 + $0x7] sm:$0x1]
    %v23 = vld [vmem:[%s2 + $0x8] sm:$0x1]
    %v24 = vld [vmem:[%s2 + $0x9] sm:$0x1]
    %v25 = vld [vmem:[%s1] sm:$0xff]
    %v26 = vld [vmem:[%s1 + $0x8] sm:$0xff]
    %v27 = vld [vmem:[%s1 + $0x10] sm:$0xff]
    %v28 = vld [vmem:[%s1 + $0x18] sm:$0xff]
    %v29 = vld [vmem:[%s1 + $0x20] sm:$0xff]
    %v30 = vld [vmem:[%s1 + $0x28] sm:$0xff]
    %v31 = vld [vmem:[%s1 + $0x30] sm:$0xff]
    %v32 = vld [vmem:[%s1 + $0x38] sm:$0xff]
    %v33 = vld [vmem:[%s1 + $0x40] sm:$0xff]
    %v34 = vld [vmem:[%s1 + $0x48] sm:$0xff]
    %v35 = vld [vmem:[%s1 + $0x50] sm:$0xff]
    %v36 = vld [vmem:[%s1 + $0x58] sm:$0xff]
    %v37 = vld [vmem:[%s0] sm:$0xff]
    %v38 = vld [vmem:[%s0 + $0x8] sm:$0xff]
    %v39 = vlaneseq
    %v40 = vshrl.u32 %v39, 7
    %v41 = vsub.s32 0, %v40
    %v42 = vrot.slane %v15, %v41
    %v43 = vsub.f32 %v37, %v42
    %v44 = vsub.f32 %v38, %v42
    %v45 = vlaneseq
    %v46 = vshrl.u32 %v45, 7
    %v47 = vsub.s32 0, %v46
    %v48 = vrot.slane %v16, %v47
    %v49 = vmul.f32 %v43, %v48
    %v50 = vmul.f32 %v44, %v48
    %v51 = vlaneseq
    %v52 = vshrl.u32 %v51, 7
    %v53 = vsub.s32 0, %v52
    %v54 = vrot.slane %v17, %v53
    %vm55 = vcmask 261120
    %v57 = vsel %vm55, %v49, 0
    %v60 = vsel %vm55, %v50, 0
    %62 = vmatprep.subr.mxu0 0.0
    %63 = vmatpush1.msra.mxu0 0.0
    %64 = vmatprep.subr.mxu0 0.0
    %65 = vmatpush1.msra.mxu0 0.0
    %66 = vmatprep.subr.mxu0 0.0
    %67 = vmatpush1.msra.mxu0 0.0
    %68 = vmatprep.subr.mxu0 0.0
    %69 = vmatpush1.msra.mxu0 0.0
    %70 = vmatprep.subr.mxu0 0.0
    %71 = vmatpush1.msra.mxu0 0.0
    %72 = vmatprep.subr.mxu0 0.0
    %73 = vmatpush1.msra.mxu0 0.0
    %74 = vmatprep.subr.mxu0 0.0
    %75 = vmatpush1.msra.mxu0 0.0
    %76 = vmatprep.subr.mxu0 0.0
    %77 = vmatpush1.msra.mxu0 0.0
    %78 = vmatprep.subr.mxu0 0.0
    %79 = vmatpush1.msra.mxu0 0.0
    %80 = vmatprep.subr.mxu0 0.0
    %81 = vmatpush1.msra.mxu0 0.0
    %82 = vmatprep.subr.mxu0 0.0
    %83 = vmatpush1.msra.mxu0 0.0
    %84 = vmatprep.subr.mxu0 0.0
    %85 = vmatpush1.msra.mxu0 0.0
    %86 = vmatprep.subr.mxu0 0.0
    %87 = vmatpush1.msra.mxu0 %v28
    %88 = vmatprep.subr.mxu0 0.0
    %89 = vmatpush1.msra.mxu0 %v27
    %90 = vmatprep.subr.mxu0 0.0
    %91 = vmatpush1.msra.mxu0 %v26
    %92 = vmatprep.subr.mxu0 0.0
    %93 = vmatpush1.msra.mxu0 %v25
    %94 = vmatprep.subr.mxu0 0.0
    %95 = vmatpush2.msra.mxu0 0.0
    %96 = vmatprep.subr.mxu0 0.0
    %97 = vmatpush2.msra.mxu0 0.0
    %98 = vmatprep.subr.mxu0 0.0
    %99 = vmatpush2.msra.mxu0 0.0
    %100 = vmatprep.subr.mxu0 0.0
    %101 = vmatpush2.msra.mxu0 0.0
    %102 = vmatprep.subr.mxu0 0.0
    %103 = vmatpush2.msra.mxu0 0.0
    %104 = vmatprep.subr.mxu0 0.0
    %105 = vmatpush2.msra.mxu0 0.0
    %106 = vmatprep.subr.mxu0 0.0
    %107 = vmatpush2.msra.mxu0 0.0
    %108 = vmatprep.subr.mxu0 0.0
    %109 = vmatpush2.msra.mxu0 0.0
    %110 = vmatprep.subr.mxu0 0.0
    %111 = vmatpush2.msra.mxu0 0.0
    %112 = vmatprep.subr.mxu0 0.0
    %113 = vmatpush2.msra.mxu0 0.0
    %114 = vmatprep.subr.mxu0 0.0
    %115 = vmatpush2.msra.mxu0 0.0
    %116 = vmatprep.subr.mxu0 0.0
    %117 = vmatpush2.msra.mxu0 0.0
    %118 = vmatprep.subr.mxu0 0.0
    %119 = vmatpush2.msra.mxu0 0.0
    %120 = vmatprep.subr.mxu0 0.0
    %121 = vmatpush2.msra.mxu0 0.0
    %122 = vmatprep.subr.mxu0 0.0
    %123 = vmatpush2.msra.mxu0 0.0
    %124 = vmatprep.subr.mxu0 0.0
    %125 = vmatpush2.msra.mxu0 0.0
    %126 = vmatprep.mubr.f32.mxu0 0.0
    %127 = vmatmul.mubr.f32.gmra.mxu0 %v57
    %v128 = vpop.f32.mrf.mxu0
    %v129 = vadd.f32 %v54, %v128
    %v130 = vpop.f32.mrf.mxu0
    %131 = vmatprep.mubr.f32.mxu0 0.0
    %132 = vmatmul.mubr.f32.gmra.mxu0 %v60
    %v133 = vpop.f32.mrf.mxu0
    %v134 = vadd.f32 %v54, %v133
    %v135 = vpop.f32.mrf.mxu0
    %136 = vdwg.mxu0
    %v137 = vmax.f32 %v129, 0.0
    %v138 = vmax.f32 %v134, 0.0
    %vm139 = vcmask 523264
    %v140 = vsel %vm139, %v137, 0.0
    %141 = vadd.xlane.f32.xlu0 %v140
    %v142 = vpop.xlane.xlu0 %141
    %v143 = vsel %vm139, %v138, 0.0
    %144 = vadd.xlane.f32.xlu0 %v143
    %v145 = vpop.xlane.xlu0 %144
    %v146 = vrcp.pop 64.0
    %v147 = vmul.f32 %v142, %v146
    %v148 = vmul.f32 %v145, %v146
    %v149 = vsub.f32 %v137, %v147
    %v150 = vsub.f32 %v138, %v148
    %v151 = vmul.f32 %v149, %v149
    %v152 = vmul.f32 %v150, %v150
    %v153 = vsel %vm139, %v151, 0.0
    %154 = vadd.xlane.f32.xlu0 %v153
    %v155 = vpop.xlane.xlu0 %154
    %v156 = vsel %vm139, %v152, 0.0
    %157 = vadd.xlane.f32.xlu0 %v156
    %v158 = vpop.xlane.xlu0 %157
    %v159 = vmul.f32 %v155, %v146
    %v160 = vmul.f32 %v158, %v146
    %v161 = vadd.f32 %v159, 1e-05
    %v162 = vadd.f32 %v160, 1e-05
    %v163 = vrsqrt.pop %v161
    %v164 = vrsqrt.pop %v162
    %v165 = vmul.f32 %v149, %v163
    %v166 = vmul.f32 %v150, %v164
    %v167 = vlaneseq
    %v168 = vshrl.u32 %v167, 7
    %v169 = vsub.s32 0, %v168
    %v170 = vrot.slane %v18, %v169
    %v171 = vmul.f32 %v165, %v170
    %v172 = vmul.f32 %v166, %v170
    %v173 = vlaneseq
    %v174 = vshrl.u32 %v173, 7
    %v175 = vsub.s32 0, %v174
    %v176 = vrot.slane %v19, %v175
    %v177 = vadd.f32 %v171, %v176
    %v178 = vadd.f32 %v172, %v176
    %v179 = vlaneseq
    %v180 = vshrl.u32 %v179, 7
    %v181 = vsub.s32 0, %v180
    %v182 = vrot.slane %v20, %v181
    %v183 = vmul.f32 %v177, %v182
    %v184 = vmul.f32 %v178, %v182
    %v185 = vsel %vm139, %v183, 0.0
    %186 = vadd.xlane.f32.xlu0 %v185
    %v187 = vpop.xlane.xlu0 %186
    %v188 = vsel %vm139, %v184, 0.0
    %189 = vadd.xlane.f32.xlu0 %v188
    %v190 = vpop.xlane.xlu0 %189
    %v191 = vlaneseq
    %v192 = vshrl.u32 %v191, 7
    %v193 = vsub.s32 0, %v192
    %v194 = vrot.slane %v24, %v193
    %v195 = vadd.f32 %v187, %v194
    %v196 = vadd.f32 %v190, %v194
    %vm197 = vcmask 7168
    %v198 = vsel %vm197, %v195, -inf
    %v199 = vsel %vm197, %v196, -inf
    %v200 = vmax.f32 %v198, %v199
    %v201 = vrot.slane %v200, 4
    %v202 = vmax.f32 %v200, %v201
    %v203 = vrot.slane %v202, 2
    %v204 = vmax.f32 %v202, %v203
    %v205 = vrot.slane %v204, 1
    %v206 = vmax.f32 %v204, %v205
    %v207 = vsub.f32 %v195, %v206
    %v208 = vsub.f32 %v196, %v206
    %v209 = vmul.f32 %v207, 1.442695
    %v210 = vpow.pop %v209
    %v211 = vmul.f32 %v208, 1.442695
    %v212 = vpow.pop %v211
    %v213 = vsel %vm197, %v210, 0.0
    %v214 = vsel %vm197, %v212, 0.0
    %v215 = vadd.f32 %v213, %v214
    %v216 = vrot.slane %v215, 4
    %v217 = vadd.f32 %v215, %v216
    %v218 = vrot.slane %v217, 2
    %v219 = vadd.f32 %v217, %v218
    %v220 = vrot.slane %v219, 1
    %v221 = vadd.f32 %v219, %v220
    %v222 = vrcp.pop %v221
    %v223 = vmul.f32 %v210, %v222
    %v224 = vmul.f32 %v212, %v222
    %226 = vset.pattern.permute.xlu0 0
    %227 = vperm.xlu0 %226, %v223
    %v228 = vpop.permute.xlu0 %227
    %231 = vset.pattern.permute.xlu0 0
    %232 = vperm.xlu0 %231, %v224
    %v233 = vpop.permute.xlu0 %232
    %v235 = vmul.f32 %v228, %v177
    %v236 = vmul.f32 %v233, %v178
    %v237 = vsel %vm139, %v235, 0.0
    %v238 = vsel %vm139, %v236, 0.0
    %v239 = vadd.f32 %v237, %v238
    %v240 = vrot.slane %v239, 4
    %v241 = vadd.f32 %v239, %v240
    %v242 = vrot.slane %v241, 2
    %v243 = vadd.f32 %v241, %v242
    %v244 = vrot.slane %v243, 1
    %v245 = vadd.f32 %v243, %v244
    %v247 = vsel %vm139, %v245, 0
    %249 = vmatprep.subr.mxu0 0.0
    %250 = vmatpush1.msra.mxu0 0.0
    %251 = vmatprep.subr.mxu0 0.0
    %252 = vmatpush1.msra.mxu0 0.0
    %253 = vmatprep.subr.mxu0 0.0
    %254 = vmatpush1.msra.mxu0 0.0
    %255 = vmatprep.subr.mxu0 0.0
    %256 = vmatpush1.msra.mxu0 0.0
    %257 = vmatprep.subr.mxu0 0.0
    %258 = vmatpush1.msra.mxu0 0.0
    %259 = vmatprep.subr.mxu0 0.0
    %260 = vmatpush1.msra.mxu0 0.0
    %261 = vmatprep.subr.mxu0 0.0
    %262 = vmatpush1.msra.mxu0 0.0
    %263 = vmatprep.subr.mxu0 0.0
    %264 = vmatpush1.msra.mxu0 0.0
    %265 = vmatprep.subr.mxu0 0.0
    %266 = vmatpush1.msra.mxu0 %v36
    %267 = vmatprep.subr.mxu0 0.0
    %268 = vmatpush1.msra.mxu0 %v35
    %269 = vmatprep.subr.mxu0 0.0
    %270 = vmatpush1.msra.mxu0 %v34
    %271 = vmatprep.subr.mxu0 0.0
    %272 = vmatpush1.msra.mxu0 %v33
    %273 = vmatprep.subr.mxu0 0.0
    %274 = vmatpush1.msra.mxu0 %v32
    %275 = vmatprep.subr.mxu0 0.0
    %276 = vmatpush1.msra.mxu0 %v31
    %277 = vmatprep.subr.mxu0 0.0
    %278 = vmatpush1.msra.mxu0 %v30
    %279 = vmatprep.subr.mxu0 0.0
    %280 = vmatpush1.msra.mxu0 %v29
    %281 = vmatprep.subr.mxu0 0.0
    %282 = vmatpush2.msra.mxu0 0.0
    %283 = vmatprep.subr.mxu0 0.0
    %284 = vmatpush2.msra.mxu0 0.0
    %285 = vmatprep.subr.mxu0 0.0
    %286 = vmatpush2.msra.mxu0 0.0
    %287 = vmatprep.subr.mxu0 0.0
    %288 = vmatpush2.msra.mxu0 0.0
    %289 = vmatprep.subr.mxu0 0.0
    %290 = vmatpush2.msra.mxu0 0.0
    %291 = vmatprep.subr.mxu0 0.0
    %292 = vmatpush2.msra.mxu0 0.0
    %293 = vmatprep.subr.mxu0 0.0
    %294 = vmatpush2.msra.mxu0 0.0
    %295 = vmatprep.subr.mxu0 0.0
    %296 = vmatpush2.msra.mxu0 0.0
    %297 = vmatprep.subr.mxu0 0.0
    %298 = vmatpush2.msra.mxu0 0.0
    %299 = vmatprep.subr.mxu0 0.0
    %300 = vmatpush2.msra.mxu0 0.0
    %301 = vmatprep.subr.mxu0 0.0
    %302 = vmatpush2.msra.mxu0 0.0
    %303 = vmatprep.subr.mxu0 0.0
    %304 = vmatpush2.msra.mxu0 0.0
    %305 = vmatprep.subr.mxu0 0.0
    %306 = vmatpush2.msra.mxu0 0.0
    %307 = vmatprep.subr.mxu0 0.0
    %308 = vmatpush2.msra.mxu0 0.0
    %309 = vmatprep.subr.mxu0 0.0
    %310 = vmatpush2.msra.mxu0 0.0
    %311 = vmatprep.subr.mxu0 0.0
    %312 = vmatpush2.msra.mxu0 0.0
    %313 = vmatprep.mubr.f32.mxu0 0.0
    %314 = vmatmul.mubr.f32.gmra.mxu0 %v247
    %v315 = vpop.f32.mrf.mxu0
    %v316 = vadd.f32 %v21, %v315
    %v317 = vpop.f32.mrf.mxu0
    %318 = vdwg.mxu0
    %v319 = vmax.f32 %v316, 0.0
    %vm320 = vcmask 122880
    %v321 = vsel %vm320, %v319, 0.0
    %322 = vadd.xlane.f32.xlu0 %v321
    %v323 = vpop.xlane.xlu0 %322
    %v324 = vrcp.pop 16.0
    %v325 = vmul.f32 %v323, %v324
    %v326 = vsub.f32 %v319, %v325
    %v327 = vmul.f32 %v326, %v326
    %v328 = vsel %vm320, %v327, 0.0
    %329 = vadd.xlane.f32.xlu0 %v328
    %v330 = vpop.xlane.xlu0 %329
    %v331 = vmul.f32 %v330, %v324
    %v332 = vadd.f32 %v331, 1e-05
    %v333 = vrsqrt.pop %v332
    %v334 = vmul.f32 %v326, %v333
    %v335 = vmul.f32 %v334, %v22
    %v336 = vadd.f32 %v335, %v23
    %337 = vst.msk [vmem:[#allocation2] sm:$0x1] %vm320, %v336
    // Predicated region
    $region14: #{tpu_custom_call.1} parent=1 // pred_check
      _
    $region15: #{tpu_custom_call.1} parent=1 // pred_check_branch
      %339 = sbr.rel (0) target = $region17
    $region16: #{tpu_custom_call.1} parent=1 // pred_region
      %s341 = ssub.s32 16, 16
      %342 = vsyncadd [#allocation3], %s341
      %s344 = sshll.u32 [#allocation2], 4
      %s345 = int_to_ptr.vmem [resolvable:$true] %s344
      %347 = dma.vmem_to_hbm [thread:$0]  %s345, 16, %s3, [#allocation3]
    $region17: #{tpu_custom_call.1} parent=1 // pred_fallthru
      _
    // Predicated region
    $region18: #{tpu_custom_call.1} parent=1 // pred_check
      _
    $region19: #{tpu_custom_call.1} parent=1 // pred_check_branch
      %349 = sbr.rel (0) target = $region21
    $region20: #{tpu_custom_call.1} parent=1 // pred_region
      %350 = dma.done [#allocation3], 16
    $region21: #{tpu_custom_call.1} parent=1 // pred_fallthru
      _
    %351 = vsyncpa [#allocation3], 1

</llo_original>
